<compile_context>
chip_gen: v6e
topology: v6e:2x2x1
jax: 0.10.0
libtpu: 0.0.40
codegen_flags: <defaults>
</compile_context>

<pallas_src>
import functools

import jax
import jax.numpy as jnp
from jax import lax
from jax.experimental import pallas as pl
from jax.experimental.pallas import tpu as pltpu


def _focal_loss_kernel(x_ref, t_ref, out_ref, acc_ref, *,
                       alpha, gamma, ignore_index,
                       rows_per_block, rows_total, tiles_per_shard, ragged):
    p = pl.program_id(1)
    j = pl.program_id(2)

    @pl.when(j == 0)
    def _init():
        acc_ref[...] = jnp.zeros_like(acc_ref)

    C = x_ref.shape[1]
    t = t_ref[0, 0].astype(jnp.int32)                       # (R, 128)

    # Numerically stable log-sum-exp over classes + gather of the target logit,
    # streaming one class slab at a time (no full-block f32 copy).
    if C <= 128:
        x0 = x_ref[0, 0].astype(jnp.float32)                # (R, 128)
        m = x0
        for c in range(1, C):
            m = jnp.maximum(m, x_ref[0, c].astype(jnp.float32))
        se = jnp.exp(x0 - m)
        x_t = jnp.where(t == 0, x0, 0.0)
        for c in range(1, C):
            xc = x_ref[0, c].astype(jnp.float32)
            se = se + jnp.exp(xc - m)
            x_t = x_t + jnp.where(t == c, xc, 0.0)
    else:
        # Rolled fallback for very large class counts (keeps trace size bounded).
        x0 = x_ref[0, 0].astype(jnp.float32)
        m = lax.fori_loop(
            1, C, lambda c, mm: jnp.maximum(mm, x_ref[0, c].astype(jnp.float32)), x0)

        def _body(c, carry):
            se_c, xt_c = carry
            xc = x_ref[0, c].astype(jnp.float32)
            return se_c + jnp.exp(xc - m), xt_c + jnp.where(t == c, xc, 0.0)

        se, x_t = lax.fori_loop(1, C, _body,
                                (jnp.exp(x0 - m), jnp.where(t == 0, x0, 0.0)))

    ce = (m + jnp.log(se)) - x_t                            # (R, 128)

    # Validity: ignore_index pixels (also covers any host padding of HW to a multiple
    # of 128).  The row-bounds mask is only emitted when a ragged last tile / phantom
    # shard tile can actually occur (trace-time decision).
    valid = t != ignore_index
    if ragged:
        row = lax.broadcasted_iota(jnp.int32, (rows_per_block, 128), 0)
        tile_idx = p * tiles_per_shard + j
        valid = jnp.logical_and(valid, tile_idx * rows_per_block + row < rows_total)
    ce = jnp.where(valid, ce, 0.0)   # mask BEFORE any focal math (NaN/Inf safety)

    # focal = alpha * (1 - exp(-ce))**gamma * ce, specialized at trace time.
    if gamma == 0.0:
        focal = ce
    else:
        one_minus_pt = -jnp.expm1(-ce)                      # stable 1 - exp(-ce)
        gi = int(gamma)
        if float(gi) == float(gamma) and 1 <= gi <= 8:
            w = one_minus_pt
            for _ in range(gi - 1):
                w = w * one_minus_pt
        else:
            w = one_minus_pt ** jnp.float32(gamma)
        focal = w * ce
    if alpha != 1.0:
        focal = jnp.float32(alpha) * focal

    acc_ref[...] += focal                                   # dense (R,128) accumulate

    @pl.when(j == pl.num_programs(2) - 1)
    def _flush():
        s = jnp.sum(acc_ref[...])                           # one reduce per (image, shard)
        out_ref[...] = jnp.broadcast_to(s, out_ref.shape)


def focal_loss(inputs, targets, *, alpha=1.0, gamma=0.0, size_average=True,
               ignore_index=255, target_block_bytes=2 * 1024 * 1024,
               pixel_shards=None):
    """inputs: (N, C, H, W) float logits (f32/bf16); targets: (N, H, W) integer labels."""
    N, C, H, W = inputs.shape
    HW = H * W
    P = N * HW

    # View pixels as (rows, 128) lanes.  Free reshape when HW % 128 == 0; otherwise a
    # one-time pad with ignore_index labels (+ zero logits) keeps all in-kernel
    # masking on the cheap `t != ignore_index` path.
    HW_pad = ((HW + 127) // 128) * 128
    R_total = HW_pad // 128
    if HW_pad == HW:
        x4 = inputs.reshape(N, C, R_total, 128)
        t4 = targets.reshape(N, 1, R_total, 128)
    else:
        pad = HW_pad - HW
        x4 = jnp.pad(inputs.reshape(N, C, HW),
                     ((0, 0), (0, 0), (0, pad))).reshape(N, C, R_total, 128)
        t4 = jnp.pad(targets.reshape(N, HW), ((0, 0), (0, pad)),
                     constant_values=ignore_index).reshape(N, 1, R_total, 128)

    # Rows per block from a ~2 MiB logits-block budget (amortizes the fixed per-step
    # pipeline overhead); rows are a multiple of 8 sublanes, capped so the f32
    # accumulator stays small.
    x_item = jnp.dtype(inputs.dtype).itemsize
    t_item = jnp.dtype(t4.dtype).itemsize
    r_budget = target_block_bytes // max(1, C * 128 * x_item)
    r_budget = max(8, min(4096, (r_budget // 8) * 8))
    if r_budget >= R_total:
        R = int(R_total)          # full-extent block: always a legal block shape
        n_hw = 1
    else:
        R = int(r_budget)         # multiple of 8; ragged last tile masked in-kernel
        n_hw = pl.cdiv(R_total, R)

    # Optional pixel-axis split (second 'parallel' grid dim) so both v7x TensorCores
    # get work even for a single image; harmless on single-TC v5e/v6e.
    if pixel_shards is None:
        pixel_shards = 2 if (N == 1 and n_hw >= 2) else 1
    n_par = max(1, min(int(pixel_shards), n_hw))
    tiles_per_shard = pl.cdiv(n_hw, n_par)
    ragged = (n_par * tiles_per_shard * R) != R_total
    clamp = n_par * tiles_per_shard > n_hw
    last_tile = n_hw - 1

    def in_map(n, p, j):
        tile = p * tiles_per_shard + j
        if clamp:
            # Phantom tiles of an uneven shard re-read the last real block; their rows
            # are fully masked in-kernel (tile*R >= R_total).
            tile = jnp.minimum(tile, last_tile)
        return (n, 0, tile, 0)

    kernel = functools.partial(
        _focal_loss_kernel,
        alpha=float(alpha), gamma=float(gamma), ignore_index=int(ignore_index),
        rows_per_block=int(R), rows_total=int(R_total),
        tiles_per_shard=int(tiles_per_shard), ragged=bool(ragged))

    # Explicit VMEM budget: double-buffered inputs + targets + accumulator + outputs,
    # kept well under v7x's 64 MiB physical VMEM and above v5e's 16 MiB scoped default.
    vmem_need = (2 * (C * R * 128 * x_item + R * 128 * t_item)
                 + R * 128 * 4 + 2 * 8 * 128 * 4)
    vmem_limit = int(min(48 * 1024 * 1024, max(24 * 1024 * 1024, 2 * vmem_need)))

    cost = pl.CostEstimate(
        flops=int(6 * C * N * HW_pad),
        transcendentals=int((C + 2) * N * HW_pad),
        bytes_accessed=int(N * HW_pad * (C * x_item + t_item)
                           + N * n_par * 8 * 128 * 4))

    partials = pl.pallas_call(
        kernel,
        out_shape=jax.ShapeDtypeStruct((N, n_par, 8, 128), jnp.float32),
        grid_spec=pltpu.PrefetchScalarGridSpec(
            num_scalar_prefetch=0,
            grid=(N, n_par, tiles_per_shard),
            in_specs=[
                pl.BlockSpec((1, C, R, 128), in_map),
                pl.BlockSpec((1, 1, R, 128), in_map),
            ],
            out_specs=pl.BlockSpec((1, 1, 8, 128), lambda n, p, j: (n, p, 0, 0)),
            scratch_shapes=[pltpu.VMEM((R, 128), jnp.float32)],
        ),
        compiler_params=pltpu.CompilerParams(
            dimension_semantics=("parallel", "parallel", "arbitrary"),
            vmem_limit_bytes=vmem_limit),
        cost_estimate=cost,
    )(x4, t4)

    loss_sum = jnp.sum(partials[:, :, 0, 0])
    if size_average:
        # PyTorch .mean() divides by ALL N*H*W elements, including ignored ones.
        return loss_sum / jnp.float32(P)
    return loss_sum


def _focal_loss_ref(inputs, targets, *, alpha=1.0, gamma=0.0, size_average=True,
                    ignore_index=255):
    """Pure-JAX reference mirroring F.cross_entropy(reduction='none', ignore_index)."""
    N, C, H, W = inputs.shape
    x = jnp.transpose(inputs, (0, 2, 3, 1)).reshape(-1, C).astype(jnp.float32)
    t = targets.reshape(-1).astype(jnp.int32)
    logz = jax.nn.logsumexp(x, axis=-1)
    t_safe = jnp.where(t == ignore_index, 0, t)
    x_t = jnp.take_along_axis(x, t_safe[:, None], axis=-1)[:, 0]
    ce = jnp.where(t == ignore_index, 0.0, logz - x_t)
    pt = jnp.exp(-ce)
    focal = alpha * (1.0 - pt) ** gamma * ce
    return focal.mean() if size_average else focal.sum()


if __name__ == "__main__":
    key = jax.random.PRNGKey(0)
    k1, k2, k3, k4, k5 = jax.random.split(key, 5)

    # --- Config 1/2: module defaults, then gamma>0 / alpha / sum ------------------
    N, C, H, W = 2, 4, 16, 16
    logits = jax.random.normal(k1, (N, C, H, W), dtype=jnp.float32)
    targets = jax.random.randint(k2, (N, H, W), 0, C, dtype=jnp.int32)
    ignore_mask = jax.random.bernoulli(k3, 0.1, (N, H, W))
    targets = jnp.where(ignore_mask, 255, targets)

    out = jax.block_until_ready(focal_loss(logits, targets, alpha=1.0, gamma=0.0,
                                           size_average=True, ignore_index=255))
    ref = _focal_loss_ref(logits, targets, alpha=1.0, gamma=0.0,
                          size_average=True, ignore_index=255)
    assert jnp.allclose(out, ref, rtol=1e-5, atol=1e-5), (out, ref)

    out2 = jax.block_until_ready(focal_loss(logits, targets, alpha=0.25, gamma=2.0,
                                            size_average=False, ignore_index=255))
    ref2 = _focal_loss_ref(logits, targets, alpha=0.25, gamma=2.0,
                           size_average=False, ignore_index=255)
    assert jnp.allclose(out2, ref2, rtol=1e-5, atol=1e-5), (out2, ref2)

    # --- Config 3: N=1 + small block budget -> multi-tile, pixel-sharded (v7x
    #     dual-core) path with a ragged last tile ----------------------------------
    N3, C3, H3, W3 = 1, 5, 48, 40
    logits3 = jax.random.normal(k4, (N3, C3, H3, W3), dtype=jnp.float32)
    targets3 = jax.random.randint(k5, (N3, H3, W3), 0, C3, dtype=jnp.int32)
    targets3 = jnp.where(jax.random.bernoulli(k3, 0.1, (N3, H3, W3)), 255, targets3)
    out3 = jax.block_until_ready(
        focal_loss(logits3, targets3, alpha=0.5, gamma=2.0, size_average=True,
                   ignore_index=255, target_block_bytes=5 * 128 * 8 * 4))
    ref3 = _focal_loss_ref(logits3, targets3, alpha=0.5, gamma=2.0,
                           size_average=True, ignore_index=255)
    assert jnp.allclose(out3, ref3, rtol=1e-5, atol=1e-5), (out3, ref3)

    # --- Config 4: HW not a multiple of 128 (host pad via ignore_index) -----------
    N4, C4, H4, W4 = 2, 3, 10, 13
    logits4 = jax.random.normal(k1, (N4, C4, H4, W4), dtype=jnp.float32)
    targets4 = jax.random.randint(k2, (N4, H4, W4), 0, C4, dtype=jnp.int32)
    out4 = jax.block_until_ready(focal_loss(logits4, targets4))
    ref4 = _focal_loss_ref(logits4, targets4)
    assert jnp.allclose(out4, ref4, rtol=1e-5, atol=1e-5), (out4, ref4)

    print("KERNEL_OK")
</pallas_src>

<mosaic_0001>
module attributes {stable_mosaic.version = 11 : i64} {
  func.func @_focal_loss_kernel(%arg0: i32, %arg1: i32, %arg2: i32, %arg3: memref<1x4x2x128xf32, #tpu.memory_space<vmem>>, %arg4: memref<1x1x2x128xi32, #tpu.memory_space<vmem>>, %arg5: memref<1x1x8x128xf32, #tpu.memory_space<vmem>>, %arg6: memref<2x128xf32, #tpu.memory_space<vmem>>) attributes {dimension_semantics = [#tpu.dimension_semantics<parallel>, #tpu.dimension_semantics<parallel>, #tpu.dimension_semantics<arbitrary>], iteration_bounds = array<i64: 2, 1, 1>, scalar_prefetch = 0 : i64, scratch_operands = 1 : i64, tpu.core_type = #tpu.core_type<tc>, window_params = [{transform_indices = @transform_0, window_bounds = array<i64: 1, 4, 2, 128>}, {transform_indices = @transform_1, window_bounds = array<i64: 1, 1, 2, 128>}, {transform_indices = @transform_2, window_bounds = array<i64: 1, 1, 8, 128>}]} {
    %c0_i32 = arith.constant 0 : i32
    %0 = arith.cmpi eq, %arg2, %c0_i32 : i32
    %1 = arith.extui %0 : i1 to i32
    %c0_i32_0 = arith.constant 0 : i32
    %2 = arith.cmpi ne, %1, %c0_i32_0 : i32
    scf.if %2 {
      %cst_40 = arith.constant 0.000000e+00 : f32
      %65 = vector.broadcast %cst_40 : f32 to vector<2x128xf32>
      %c0_41 = arith.constant 0 : index
      %c0_42 = arith.constant 0 : index
      %66 = vector.load %arg6[%c0_41, %c0_42] : memref<2x128xf32, #tpu.memory_space<vmem>>, vector<2x128xf32>
      tpu.vector_store %arg6[%c0_41, %c0_42], %65 {strides = array<i32>} : memref<2x128xf32, #tpu.memory_space<vmem>>, vector<2x128xf32>,
    } else {
    }
    %c0 = arith.constant 0 : index
    %c0_1 = arith.constant 0 : index
    %c0_2 = arith.constant 0 : index
    %c0_3 = arith.constant 0 : index
    %3 = vector.load %arg4[%c0, %c0_1, %c0_2, %c0_3] : memref<1x1x2x128xi32, #tpu.memory_space<vmem>>, vector<1x1x2x128xi32>
    %4 = vector.shape_cast %3 : vector<1x1x2x128xi32> to vector<2x128xi32>
    %c0_4 = arith.constant 0 : index
    %c0_5 = arith.constant 0 : index
    %c0_6 = arith.constant 0 : index
    %c0_7 = arith.constant 0 : index
    %5 = vector.load %arg3[%c0_4, %c0_5, %c0_6, %c0_7] : memref<1x4x2x128xf32, #tpu.memory_space<vmem>>, vector<1x1x2x128xf32>
    %6 = vector.shape_cast %5 : vector<1x1x2x128xf32> to vector<2x128xf32>
    %c0_8 = arith.constant 0 : index
    %c1 = arith.constant 1 : index
    %c0_9 = arith.constant 0 : index
    %c0_10 = arith.constant 0 : index
    %7 = vector.load %arg3[%c0_8, %c1, %c0_9, %c0_10] : memref<1x4x2x128xf32, #tpu.memory_space<vmem>>, vector<1x1x2x128xf32>
    %8 = vector.shape_cast %7 : vector<1x1x2x128xf32> to vector<2x128xf32>
    %9 = arith.maximumf %6, %8 : vector<2x128xf32>
    %c0_11 = arith.constant 0 : index
    %c2 = arith.constant 2 : index
    %c0_12 = arith.constant 0 : index
    %c0_13 = arith.constant 0 : index
    %10 = vector.load %arg3[%c0_11, %c2, %c0_12, %c0_13] : memref<1x4x2x128xf32, #tpu.memory_space<vmem>>, vector<1x1x2x128xf32>
    %11 = vector.shape_cast %10 : vector<1x1x2x128xf32> to vector<2x128xf32>
    %12 = arith.maximumf %9, %11 : vector<2x128xf32>
    %c0_14 = arith.constant 0 : index
    %c3 = arith.constant 3 : index
    %c0_15 = arith.constant 0 : index
    %c0_16 = arith.constant 0 : index
    %13 = vector.load %arg3[%c0_14, %c3, %c0_15, %c0_16] : memref<1x4x2x128xf32, #tpu.memory_space<vmem>>, vector<1x1x2x128xf32>
    %14 = vector.shape_cast %13 : vector<1x1x2x128xf32> to vector<2x128xf32>
    %15 = arith.maximumf %12, %14 : vector<2x128xf32>
    %16 = arith.subf %6, %15 : vector<2x128xf32>
    %17 = math.exp %16 : vector<2x128xf32>
    %c0_i32_17 = arith.constant 0 : i32
    %18 = vector.broadcast %c0_i32_17 : i32 to vector<2x128xi32>
    %19 = arith.cmpi eq, %4, %18 : vector<2x128xi32>
    %cst = arith.constant 0.000000e+00 : f32
    %20 = vector.broadcast %cst : f32 to vector<2x128xf32>
    %21 = arith.select %19, %6, %20 : vector<2x128xi1>, vector<2x128xf32>
    %c0_18 = arith.constant 0 : index
    %c1_19 = arith.constant 1 : index
    %c0_20 = arith.constant 0 : index
    %c0_21 = arith.constant 0 : index
    %22 = vector.load %arg3[%c0_18, %c1_19, %c0_20, %c0_21] : memref<1x4x2x128xf32, #tpu.memory_space<vmem>>, vector<1x1x2x128xf32>
    %23 = vector.shape_cast %22 : vector<1x1x2x128xf32> to vector<2x128xf32>
    %24 = arith.subf %23, %15 : vector<2x128xf32>
    %25 = math.exp %24 : vector<2x128xf32>
    %26 = arith.addf %17, %25 : vector<2x128xf32>
    %c1_i32 = arith.constant 1 : i32
    %27 = vector.broadcast %c1_i32 : i32 to vector<2x128xi32>
    %28 = arith.cmpi eq, %4, %27 : vector<2x128xi32>
    %cst_22 = arith.constant 0.000000e+00 : f32
    %29 = vector.broadcast %cst_22 : f32 to vector<2x128xf32>
    %30 = arith.select %28, %23, %29 : vector<2x128xi1>, vector<2x128xf32>
    %31 = arith.addf %21, %30 : vector<2x128xf32>
    %c0_23 = arith.constant 0 : index
    %c2_24 = arith.constant 2 : index
    %c0_25 = arith.constant 0 : index
    %c0_26 = arith.constant 0 : index
    %32 = vector.load %arg3[%c0_23, %c2_24, %c0_25, %c0_26] : memref<1x4x2x128xf32, #tpu.memory_space<vmem>>, vector<1x1x2x128xf32>
    %33 = vector.shape_cast %32 : vector<1x1x2x128xf32> to vector<2x128xf32>
    %34 = arith.subf %33, %15 : vector<2x128xf32>
    %35 = math.exp %34 : vector<2x128xf32>
    %36 = arith.addf %26, %35 : vector<2x128xf32>
    %c2_i32 = arith.constant 2 : i32
    %37 = vector.broadcast %c2_i32 : i32 to vector<2x128xi32>
    %38 = arith.cmpi eq, %4, %37 : vector<2x128xi32>
    %cst_27 = arith.constant 0.000000e+00 : f32
    %39 = vector.broadcast %cst_27 : f32 to vector<2x128xf32>
    %40 = arith.select %38, %33, %39 : vector<2x128xi1>, vector<2x128xf32>
    %41 = arith.addf %31, %40 : vector<2x128xf32>
    %c0_28 = arith.constant 0 : index
    %c3_29 = arith.constant 3 : index
    %c0_30 = arith.constant 0 : index
    %c0_31 = arith.constant 0 : index
    %42 = vector.load %arg3[%c0_28, %c3_29, %c0_30, %c0_31] : memref<1x4x2x128xf32, #tpu.memory_space<vmem>>, vector<1x1x2x128xf32>
    %43 = vector.shape_cast %42 : vector<1x1x2x128xf32> to vector<2x128xf32>
    %44 = arith.subf %43, %15 : vector<2x128xf32>
    %45 = math.exp %44 : vector<2x128xf32>
    %46 = arith.addf %36, %45 : vector<2x128xf32>
    %c3_i32 = arith.constant 3 : i32
    %47 = vector.broadcast %c3_i32 : i32 to vector<2x128xi32>
    %48 = arith.cmpi eq, %4, %47 : vector<2x128xi32>
    %cst_32 = arith.constant 0.000000e+00 : f32
    %49 = vector.broadcast %cst_32 : f32 to vector<2x128xf32>
    %50 = arith.select %48, %43, %49 : vector<2x128xi1>, vector<2x128xf32>
    %51 = arith.addf %41, %50 : vector<2x128xf32>
    %52 = math.log %46 : vector<2x128xf32>
    %53 = arith.addf %15, %52 : vector<2x128xf32>
    %54 = arith.subf %53, %51 : vector<2x128xf32>
    %c255_i32 = arith.constant 255 : i32
    %55 = vector.broadcast %c255_i32 : i32 to vector<2x128xi32>
    %56 = arith.cmpi ne, %4, %55 : vector<2x128xi32>
    %cst_33 = arith.constant 0.000000e+00 : f32
    %57 = vector.broadcast %cst_33 : f32 to vector<2x128xf32>
    %58 = arith.select %56, %54, %57 : vector<2x128xi1>, vector<2x128xf32>
    %c0_34 = arith.constant 0 : index
    %c0_35 = arith.constant 0 : index
    %59 = vector.load %arg6[%c0_34, %c0_35] : memref<2x128xf32, #tpu.memory_space<vmem>>, vector<2x128xf32>
    %60 = arith.addf %59, %58 : vector<2x128xf32>
    %c0_36 = arith.constant 0 : index
    %c0_37 = arith.constant 0 : index
    %61 = vector.load %arg6[%c0_36, %c0_37] : memref<2x128xf32, #tpu.memory_space<vmem>>, vector<2x128xf32>
    tpu.vector_store %arg6[%c0_36, %c0_37], %60 {strides = array<i32>} : memref<2x128xf32, #tpu.memory_space<vmem>>, vector<2x128xf32>,
    %c0_i32_38 = arith.constant 0 : i32
    %62 = arith.cmpi eq, %arg2, %c0_i32_38 : i32
    %63 = arith.extui %62 : i1 to i32
    %c0_i32_39 = arith.constant 0 : i32
    %64 = arith.cmpi ne, %63, %c0_i32_39 : i32
    scf.if %64 {
      %c0_40 = arith.constant 0 : index
      %c0_41 = arith.constant 0 : index
      %65 = vector.load %arg6[%c0_40, %c0_41] : memref<2x128xf32, #tpu.memory_space<vmem>>, vector<2x128xf32>
      %66 = vector.shape_cast %65 : vector<2x128xf32> to vector<1x2x128xf32>
      %cst_42 = arith.constant dense<0.000000e+00> : vector<1xf32>
      %67 = vector.multi_reduction <add>, %66, %cst_42 [1, 2] : vector<1x2x128xf32> to vector<1xf32>
      %68 = vector.shape_cast %67 : vector<1xf32> to vector<1x1x1xf32>
      %69 = vector.extract %68[0, 0, 0] : f32 from vector<1x1x1xf32>
      %70 = vector.broadcast %69 : f32 to vector<1x1x8x128xf32>
      %c0_43 = arith.constant 0 : index
      %c0_44 = arith.constant 0 : index
      %c0_45 = arith.constant 0 : index
      %c0_46 = arith.constant 0 : index
      %71 = vector.load %arg5[%c0_43, %c0_44, %c0_45, %c0_46] : memref<1x1x8x128xf32, #tpu.memory_space<vmem>>, vector<1x1x8x128xf32>
      tpu.vector_store %arg5[%c0_43, %c0_44, %c0_45, %c0_46], %70 {strides = array<i32>} : memref<1x1x8x128xf32, #tpu.memory_space<vmem>>, vector<1x1x8x128xf32>,
    } else {
    }
    return
  }
  func.func @transform_0(%arg0: i32, %arg1: i32, %arg2: i32) -> (i32, i32, i32, i32) {
    %c1_i32 = arith.constant 1 : i32
    %0 = arith.muli %arg1, %c1_i32 : i32
    %1 = arith.addi %0, %arg2 : i32
    %c0_i32 = arith.constant 0 : i32
    %c0_i32_0 = arith.constant 0 : i32
    %c0_i32_1 = arith.constant 0 : i32
    return %arg0, %c0_i32, %1, %c0_i32_0 : i32, i32, i32, i32
  }
  func.func @transform_1(%arg0: i32, %arg1: i32, %arg2: i32) -> (i32, i32, i32, i32) {
    %c1_i32 = arith.constant 1 : i32
    %0 = arith.muli %arg1, %c1_i32 : i32
    %1 = arith.addi %0, %arg2 : i32
    %c0_i32 = arith.constant 0 : i32
    %c0_i32_0 = arith.constant 0 : i32
    %c0_i32_1 = arith.constant 0 : i32
    return %arg0, %c0_i32, %1, %c0_i32_0 : i32, i32, i32, i32
  }
  func.func @transform_2(%arg0: i32, %arg1: i32, %arg2: i32) -> (i32, i32, i32, i32) {
    %c0_i32 = arith.constant 0 : i32
    %c0_i32_0 = arith.constant 0 : i32
    %c0_i32_1 = arith.constant 0 : i32
    return %arg0, %arg1, %c0_i32, %c0_i32_0 : i32, i32, i32, i32
  }
}

</mosaic_0001>

<llo_original>
// kernel: tpu_custom_call.1
$region0: #{tpu_custom_call.1}
  #allocation0 [shape = 'u32[]', space=smem, size = 0x4, offset = 0x4, fixed_abs, tag = 'smem constant byte address 0x4 - core index']
  #allocation1 [shape = 'u32[144,128]{1,0:T(1,128)}', space=vmem, size = 0x12000, scoped, tag = 'internal scratch']
  #allocation2 [shape = 'f32[2,128]{1,0:T(2,128)}', space=vmem, size = 0x400, scoped, tag = 'scratch operand']
  %s0 = inlined_call_operand.hbm [shape: f32[2,4,2,128], index: 0, kind: input, shape index: {}]
  %s1 = inlined_call_operand.hbm [shape: s32[2,1,2,128], index: 1, kind: input, shape index: {}]
  %s2 = inlined_call_operand.hbm [shape: f32[2,1,8,128], index: 2, kind: output, shape index: {}]
  %s3 = sld [smem:[#allocation0]]
  $region57: #{tpu_custom_call.1} parent=0
    _
  %s5 = ssub.s32 1, %s3
  %s6 = scalar_select 0, %s5, %s3
  $region1: #{tpu_custom_call.1} parent=0
    #allocation3 [shape = 'u8[8192]{0}', space=vmem, size = 0x2000, scoped, tag = 'input window, operand 0']
    #allocation4 [shape = 's32[2]{0}', space=sflag, size = 0x8, scoped, tag = 'scoped memory for tpu_custom_call.1']
    #allocation5 [shape = 's32[2]{0}', space=sflag, size = 0x8, scoped, tag = 'scoped memory for tpu_custom_call.1']
    #allocation6 [shape = 'u8[2048]{0}', space=vmem, size = 0x800, scoped, tag = 'input window, operand 1']
    #allocation7 [shape = 's32[2]{0}', space=sflag, size = 0x8, scoped, tag = 'scoped memory for tpu_custom_call.1']
    #allocation8 [shape = 'u8[8192]{0}', space=vmem, size = 0x2000, scoped, tag = 'output window, operand 0']
    %7 = vsyncpa [#allocation4], 0
    %s8 = scalar_lea.sflag [#allocation4], 1
    %9 = vsyncpa %s8, 0
    %10 = vsyncpa [#allocation7], 0
    %s11 = scalar_lea.sflag [#allocation7], 1
    %12 = vsyncpa %s11, 0
    %13 = vsyncpa [#allocation5], 0
    %s14 = scalar_lea.sflag [#allocation5], 1
    %15 = vsyncpa %s14, 0
    loop: start=0, step=1, limit=4
    $region2: #{tpu_custom_call.1} parent=1 // loop_pre_header
      _
    $region3: #{tpu_custom_call.1} parent=1 // loop_header
      %s17 = sphi 0, %s21
      %p18 = scmp.ge.s32.totalorder %s17, 4
      %s24 = sphi 0, %s43
      %s25 = sphi 0, %s39
      %s26 = sphi 0, %s35
      %s27 = sphi 0, %s24
      %s28 = sphi 0, %s25
      %s29 = sphi 0, %s26
      %s30 = sphi 0, %s27
      %s31 = sphi 0, %s28
      %s32 = sphi 0, %s29
      %s50 = sphi 0, %s52
      %s53 = sphi 0, %s50
      %s54 = sphi 0, %s53
      %s70 = sphi 0, %s54
      %s80 = sphi 0, %s82
      %s83 = sphi 0, %s80
      %s84 = sphi 0, %s83
      %s100 = sphi 0, %s84
      %s108 = sphi 0, %s110
      %s111 = sphi 0, %s108
      %s112 = sphi 0, %s111
      %s128 = sphi 0, %s112
    $region4: #{tpu_custom_call.1} parent=1 // loop_header_branch
      %20 = sbr.rel (%p18) target = $region8
    $region5: #{tpu_custom_call.1} parent=1 // loop_body
      %s22 = ssub.s32 %s17, 1
      %s23 = ssub.s32 %s17, 2
      %s33 = sadd.s32 1, %s26
      %p34 = scmp.ge.s32.totalorder %s33, 1
      %s35 = scalar_select %p34, 0, %s33
      %s36 = sadd.s32 1, %s25
      %s37 = scalar_select %p34, %s36, %s25
      %p38 = scmp.ge.s32.totalorder %s37, 1
      %s39 = scalar_select %p38, 0, %s37
      %s40 = sadd.s32 1, %s24
      %s41 = scalar_select %p38, %s40, %s24
      %p42 = scmp.ge.s32.totalorder %s41, 2
      %s43 = scalar_select %p42, 0, %s41
      %s44 = sadd.s32 %s25, %s26
      %s45 = sadd.s32 %s39, %s35
      %s46 = ssub.s32 %s24, %s43
      %s47 = ssub.s32 %s44, %s45
      %s48 = sor.u32 %s46, %s47
      %p49 = scmp.eq.s32.totalorder %s48, 0
      %s51 = sadd.s32 %s50, 1
      %s52 = scalar_select %p49, %s50, %s51
      %p55 = pneg %p49
      %p56 = scmp.eq.s32.totalorder %s17, 1
      %p57 = por %p55, %p56
      %p58 = scmp.ne.s32.totalorder %s50, %s53
      %p59 = scmp.eq.s32.totalorder %s17, 0
      %p60 = por %p58, %p59
      %p61 = scmp.ne.s32.totalorder %s50, %s53
      %p62 = scmp.eq.s32.totalorder %s22, 1
      %p63 = por %p61, %p62
      %p64 = scmp.ne.s32.totalorder %s53, %s54
      %p65 = scmp.eq.s32.totalorder %s22, 0
      %p66 = por %p64, %p65
      %p67 = scmp.ne.s32.totalorder %s53, %s54
      %p68 = scmp.eq.s32.totalorder %s23, 1
      %p69 = por %p67, %p68
      %p71 = scmp.ne.s32.totalorder %s54, %s70
      %p72 = scmp.eq.s32.totalorder %s23, 0
      %p73 = por %p71, %p72
      %s74 = sadd.s32 %s25, %s26
      %s75 = sadd.s32 %s39, %s35
      %s76 = ssub.s32 %s24, %s43
      %s77 = ssub.s32 %s74, %s75
      %s78 = sor.u32 %s76, %s77
      %p79 = scmp.eq.s32.totalorder %s78, 0
      %s81 = sadd.s32 %s80, 1
      %s82 = scalar_select %p79, %s80, %s81
      %p85 = pneg %p79
      %p86 = scmp.eq.s32.totalorder %s17, 1
      %p87 = por %p85, %p86
      %p88 = scmp.ne.s32.totalorder %s80, %s83
      %p89 = scmp.eq.s32.totalorder %s17, 0
      %p90 = por %p88, %p89
      %p91 = scmp.ne.s32.totalorder %s80, %s83
      %p92 = scmp.eq.s32.totalorder %s22, 1
      %p93 = por %p91, %p92
      %p94 = scmp.ne.s32.totalorder %s83, %s84
      %p95 = scmp.eq.s32.totalorder %s22, 0
      %p96 = por %p94, %p95
      %p97 = scmp.ne.s32.totalorder %s83, %s84
      %p98 = scmp.eq.s32.totalorder %s23, 1
      %p99 = por %p97, %p98
      %p101 = scmp.ne.s32.totalorder %s84, %s100
      %p102 = scmp.eq.s32.totalorder %s23, 0
      %p103 = por %p101, %p102
      %s104 = ssub.s32 %s24, %s43
      %s105 = ssub.s32 %s25, %s39
      %s106 = sor.u32 %s104, %s105
      %p107 = scmp.eq.s32.totalorder %s106, 0
      %s109 = sadd.s32 %s108, 1
      %s110 = scalar_select %p107, %s108, %s109
      %p113 = pneg %p107
      %p114 = scmp.eq.s32.totalorder %s17, 1
      %p115 = por %p113, %p114
      %p116 = scmp.ne.s32.totalorder %s108, %s111
      %p117 = scmp.eq.s32.totalorder %s17, 0
      %p118 = por %p116, %p117
      %p119 = scmp.ne.s32.totalorder %s108, %s111
      %p120 = scmp.eq.s32.totalorder %s22, 1
      %p121 = por %p119, %p120
      %p122 = scmp.ne.s32.totalorder %s111, %s112
      %p123 = scmp.eq.s32.totalorder %s22, 0
      %p124 = por %p122, %p123
      %p125 = scmp.ne.s32.totalorder %s111, %s112
      %p126 = scmp.eq.s32.totalorder %s23, 1
      %p127 = por %p125, %p126
      %p129 = scmp.ne.s32.totalorder %s112, %s128
      %p130 = scmp.eq.s32.totalorder %s23, 0
      %p131 = por %p129, %p130
      %p132 = scmp.le.s32.totalorder 1, %s17
      %p133 = scmp.lt.s32.totalorder %s17, 3
      %p134 = pnand %p132, %p133
      %p135 = pneg %p134
      // Predicated region
      $region9: #{tpu_custom_call.1} parent=5 // pred_check
        _
      $region10: #{tpu_custom_call.1} parent=5 // pred_check_branch
        %137 = sbr.rel (%p134) target = $region12
      $region11: #{tpu_custom_call.1} parent=5 // pred_region
        %s138 = ssub.s32 %s17, 1
      $region12: #{tpu_custom_call.1} parent=5 // pred_fallthru
        _
      %p139 = scmp.lt.s32.totalorder %s17, 2
      // Predicated region
      $region13: #{tpu_custom_call.1} parent=5 // pred_check
        %p140 = pneg %p139
      $region14: #{tpu_custom_call.1} parent=5 // pred_check_branch
        %142 = sbr.rel (%p140) target = $region16
      $region15: #{tpu_custom_call.1} parent=5 // pred_region
        // Predicated region
        $region17: #{tpu_custom_call.1} parent=15 // pred_check
          %p143 = pneg %p60
        $region18: #{tpu_custom_call.1} parent=15 // pred_check_branch
          %145 = sbr.rel (%p143) target = $region20
        $region19: #{tpu_custom_call.1} parent=15 // pred_region
          %s146 = sand.u32 %s50, 1
          %s147 = scalar_lea.sflag [#allocation4], %s146
          %s148 = sand.u32 %s50, 1
          %s149 = smul.addr %s148, 8
          %s150 = scalar_lea.vmem [#allocation3], %s149
          %s151 = sadd.s32 %s25, %s26
          %s153 = ssub.s32 128, 128
          %154 = vsyncadd %s147, %s153
          %s155 = smul.addr %s24, 4
          %s156 = sadd.s32 %s151, %s155
          %s157 = smul.addr %s156, 32
          %s158 = scalar_lea.hbm %s0, %s157
          %s159 = sshll.u32 %s150, 4
          %s160 = int_to_ptr.vmem [resolvable:$true] %s159
          %165 = dma.hbm_to_vmem [thread:$0]  %s158, 128, %s160, %s147, 32, 32, 2
        $region20: #{tpu_custom_call.1} parent=15 // pred_fallthru
          _
        // Predicated region
        $region21: #{tpu_custom_call.1} parent=15 // pred_check
          %p166 = pneg %p90
        $region22: #{tpu_custom_call.1} parent=15 // pred_check_branch
          %168 = sbr.rel (%p166) target = $region24
        $region23: #{tpu_custom_call.1} parent=15 // pred_region
          %s169 = sand.u32 %s80, 1
          %s170 = scalar_lea.sflag [#allocation7], %s169
          %s171 = sand.u32 %s80, 1
          %s172 = smul.addr %s171, 2
          %s173 = scalar_lea.vmem [#allocation6], %s172
          %s174 = sadd.s32 %s25, %s26
          %s176 = ssub.s32 32, 32
          %177 = vsyncadd %s170, %s176
          %s178 = sadd.s32 %s174, %s24
          %s179 = smul.addr %s178, 32
          %s180 = scalar_lea.hbm %s1, %s179
          %s182 = sshll.u32 %s173, 4
          %s183 = int_to_ptr.vmem [resolvable:$true] %s182
          %185 = dma.hbm_to_vmem [thread:$0]  %s180, 32, %s183, %s170
        $region24: #{tpu_custom_call.1} parent=15 // pred_fallthru
          _
      $region16: #{tpu_custom_call.1} parent=5 // pred_fallthru
        _
      %p186 = scmp.le.s32.totalorder 1, %s17
      %p187 = scmp.lt.s32.totalorder %s17, 3
      %p188 = pnand %p186, %p187
      %p189 = pneg %p188
      // Predicated region
      $region25: #{tpu_custom_call.1} parent=5 // pred_check
        _
      $region26: #{tpu_custom_call.1} parent=5 // pred_check_branch
        %191 = sbr.rel (%p188) target = $region28
      $region27: #{tpu_custom_call.1} parent=5 // pred_region
        %s192 = ssub.s32 %s17, 1
        %s193 = sand.u32 %s53, 1
        %s194 = scalar_lea.sflag [#allocation4], %s193
        %s195 = sand.u32 %s53, 1
        %s196 = smul.addr %s195, 8
        %s197 = scalar_lea.vmem [#allocation3], %s196
        // Predicated region
        $region29: #{tpu_custom_call.1} parent=27 // pred_check
          %p198 = pneg %p66
        $region30: #{tpu_custom_call.1} parent=27 // pred_check_branch
          %200 = sbr.rel (%p198) target = $region32
        $region31: #{tpu_custom_call.1} parent=27 // pred_region
          %201 = dma.done %s194, 128
        $region32: #{tpu_custom_call.1} parent=27 // pred_fallthru
          _
        %s202 = sand.u32 %s83, 1
        %s203 = scalar_lea.sflag [#allocation7], %s202
        %s204 = sand.u32 %s83, 1
        %s205 = smul.addr %s204, 2
        %s206 = scalar_lea.vmem [#allocation6], %s205
        // Predicated region
        $region33: #{tpu_custom_call.1} parent=27 // pred_check
          %p207 = pneg %p96
        $region34: #{tpu_custom_call.1} parent=27 // pred_check_branch
          %209 = sbr.rel (%p207) target = $region36
        $region35: #{tpu_custom_call.1} parent=27 // pred_region
          %210 = dma.done %s203, 32
        $region36: #{tpu_custom_call.1} parent=27 // pred_fallthru
          _
        %s211 = sand.u32 %s53, 1
        %s212 = scalar_lea.sflag [#allocation4], %s211
        %s213 = sand.u32 %s53, 1
        %s214 = smul.addr %s213, 8
        %s215 = scalar_lea.vmem [#allocation3], %s214
        %p216 = pneg %p66
        %p217 = pneg %p63
        %s218 = sand.u32 %s83, 1
        %s219 = scalar_lea.sflag [#allocation7], %s218
        %s220 = sand.u32 %s83, 1
        %s221 = smul.addr %s220, 2
        %s222 = scalar_lea.vmem [#allocation6], %s221
        %p223 = pneg %p96
        %p224 = pneg %p93
        %p225 = pneg %p124
        %p226 = pneg %p121
        %s227 = sand.u32 %s111, 1
        %s228 = scalar_lea.sflag [#allocation5], %s227
        %s229 = sand.u32 %s111, 1
        %s230 = smul.addr %s229, 8
        %s231 = scalar_lea.vmem [#allocation8], %s230
        %s232 = sadd.s32 %s28, %s29
        %s233 = sadd.s32 %s28, %s29
        %p234 = scmp.eq.s32.totalorder %s29, 0
        // Predicated region
        $region37: #{tpu_custom_call.1} parent=27 // pred_check
          %p235 = pneg %p234
        $region38: #{tpu_custom_call.1} parent=27 // pred_check_branch
          %237 = sbr.rel (%p235) target = $region40
        $region39: #{tpu_custom_call.1} parent=27 // pred_region
          %238 = vst [vmem:[#allocation2] sm:$0x3] 0.0
        $region40: #{tpu_custom_call.1} parent=27 // pred_fallthru
          _
        %v239 = vld [vmem:[%s206] sm:$0x3]
        %v240 = vld [vmem:[%s197] sm:$0x3]
        %s241 = scalar_lea.vmem %s197, 2 [#allocation3]
        %v242 = vld [vmem:[%s241] sm:$0x3]
        %v243 = vmax.f32 %v240, %v242
        %s244 = scalar_lea.vmem %s197, 4 [#allocation3]
        %v245 = vld [vmem:[%s244] sm:$0x3]
        %v246 = vmax.f32 %v243, %v245
        %s247 = scalar_lea.vmem %s197, 6 [#allocation3]
        %v248 = vld [vmem:[%s247] sm:$0x3]
        %v249 = vmax.f32 %v246, %v248
        %v250 = vsub.f32 %v240, %v249
        %v251 = vmul.f32 %v250, 1.442695
        %v252 = vpow.pop %v251
        %vm253 = vcmp.eq.s32.totalorder %v239, 0
        %v254 = vsel %vm253, %v240, 0.0
        %v255 = vsub.f32 %v242, %v249
        %v256 = vmul.f32 %v255, 1.442695
        %v257 = vpow.pop %v256
        %v258 = vadd.f32 %v252, %v257
        %vm259 = vcmp.eq.s32.totalorder %v239, 1
        %v260 = vsel %vm259, %v242, 0.0
        %v261 = vadd.f32 %v254, %v260
        %v262 = vsub.f32 %v245, %v249
        %v263 = vmul.f32 %v262, 1.442695
        %v264 = vpow.pop %v263
        %v265 = vadd.f32 %v258, %v264
        %vm266 = vcmp.eq.s32.totalorder %v239, 2
        %v267 = vsel %vm266, %v245, 0.0
        %v268 = vadd.f32 %v261, %v267
        %v269 = vsub.f32 %v248, %v249
        %v270 = vmul.f32 %v269, 1.442695
        %v271 = vpow.pop %v270
        %v272 = vadd.f32 %v265, %v271
        %vm273 = vcmp.eq.s32.totalorder %v239, 3
        %v274 = vsel %vm273, %v248, 0.0
        %v275 = vadd.f32 %v268, %v274
        %v276 = vlog2.pop %v272
        %v277 = vmul.f32 %v276, 0.6931472
        %v278 = vadd.f32 %v249, %v277
        %v279 = vsub.f32 %v278, %v275
        %vm280 = vcmp.ne.s32.totalorder %v239, 255
        %v281 = vsel %vm280, %v279, 0.0
        %v282 = vld [vmem:[#allocation2] sm:$0x3]
        %v283 = vadd.f32 %v282, %v281
        %284 = vst [vmem:[#allocation2] sm:$0x3] %v283
        // Predicated region
        $region41: #{tpu_custom_call.1} parent=27 // pred_check
          %p285 = pneg %p234
        $region42: #{tpu_custom_call.1} parent=27 // pred_check_branch
          %287 = sbr.rel (%p285) target = $region44
        $region43: #{tpu_custom_call.1} parent=27 // pred_region
          %v288 = vld [vmem:[#allocation2] sm:$0x3]
          %vm289 = vcmask 1041408
          %v290 = vsel %vm289, %v288, 0.0
          %291 = vadd.xlane.f32.xlu0 %v290
          %v292 = vpop.xlane.xlu0 %291
          %v293 = vrot.slane %v292, 4
          %v294 = vadd.f32 %v292, %v293
          %v295 = vrot.slane %v294, 2
          %v296 = vadd.f32 %v294, %v295
          %v297 = vrot.slane %v296, 1
          %v298 = vadd.f32 %v296, %v297
          %s299 = vtos %v298
          %v300 = vstv %s299
          %301 = vst [vmem:[%s231] sm:$0xff] %v300
        $region44: #{tpu_custom_call.1} parent=27 // pred_fallthru
          _
        %s302 = sand.u32 %s111, 1
        %s303 = scalar_lea.sflag [#allocation5], %s302
        %s304 = sand.u32 %s111, 1
        %s305 = smul.addr %s304, 8
        %s306 = scalar_lea.vmem [#allocation8], %s305
        // Predicated region
        $region45: #{tpu_custom_call.1} parent=27 // pred_check
          %p307 = pneg %p121
        $region46: #{tpu_custom_call.1} parent=27 // pred_check_branch
          %309 = sbr.rel (%p307) target = $region48
        $region47: #{tpu_custom_call.1} parent=27 // pred_region
          %s311 = ssub.s32 128, 128
          %312 = vsyncadd %s303, %s311
          %s313 = sadd.s32 %s28, %s27
          %s314 = smul.addr %s313, 128
          %s315 = scalar_lea.hbm %s2, %s314
          %s317 = sshll.u32 %s306, 4
          %s318 = int_to_ptr.vmem [resolvable:$true] %s317
          %320 = dma.vmem_to_hbm [thread:$0]  %s318, 128, %s315, %s303
        $region48: #{tpu_custom_call.1} parent=27 // pred_fallthru
          _
      $region28: #{tpu_custom_call.1} parent=5 // pred_fallthru
        _
      %p321 = scmp.le.s32.totalorder 2, %s17
      // Predicated region
      $region49: #{tpu_custom_call.1} parent=5 // pred_check
        %p322 = pneg %p321
      $region50: #{tpu_custom_call.1} parent=5 // pred_check_branch
        %324 = sbr.rel (%p322) target = $region52
      $region51: #{tpu_custom_call.1} parent=5 // pred_region
        %s325 = ssub.s32 %s17, 2
        // Predicated region
        $region53: #{tpu_custom_call.1} parent=51 // pred_check
          %p326 = pneg %p127
        $region54: #{tpu_custom_call.1} parent=51 // pred_check_branch
          %328 = sbr.rel (%p326) target = $region56
        $region55: #{tpu_custom_call.1} parent=51 // pred_region
          %s329 = sand.u32 %s112, 1
          %s330 = scalar_lea.sflag [#allocation5], %s329
          %s331 = sand.u32 %s112, 1
          %s332 = smul.addr %s331, 8
          %s333 = scalar_lea.vmem [#allocation8], %s332
          %334 = dma.done %s330, 128
        $region56: #{tpu_custom_call.1} parent=51 // pred_fallthru
          _
      $region52: #{tpu_custom_call.1} parent=5 // pred_fallthru
        _
    $region6: #{tpu_custom_call.1} parent=1 // loop_footer
      %s21 = sadd.s32 1, %s17
    $region7: #{tpu_custom_call.1} parent=1 // loop_footer_branch
      %16 = sbr.rel target = $region3
    $region8: #{tpu_custom_call.1} parent=1 // loop_exit
      _
    %335 = vsyncpa [#allocation4], 1
    %s336 = scalar_lea.sflag [#allocation4], 1
    %337 = vsyncpa %s336, 1
    %338 = vsyncpa [#allocation7], 1
    %s339 = scalar_lea.sflag [#allocation7], 1
    %340 = vsyncpa %s339, 1
    %341 = vsyncpa [#allocation5], 1
    %s342 = scalar_lea.sflag [#allocation5], 1
    %343 = vsyncpa %s342, 1

</llo_original>
